<compile_context>
chip_gen: v6e
topology: v6e:2x2x1
jax: 0.10.0
libtpu: 0.0.40
codegen_flags: <defaults>
</compile_context>

<pallas_src>
import functools

import jax
import jax.numpy as jnp
from jax.experimental import pallas as pl
from jax.experimental.pallas import tpu as pltpu


_TARGET_TILE_BYTES = 4 * 1024 * 1024   # useful x bytes per grid step (~2-4 MiB sweet spot)
_MIN_GRID_STEPS = 4                    # keep both v7x TCs busy + pipeline primed


def _round_up(n, m):
    return ((n + m - 1) // m) * m


def _cdiv(a, b):
    return -(-a // b)


def _concat_layer_kernel(x_ref, w_ref, b_ref, o_ref, *, scale):
    # x_ref: (TR, FP) VMEM  lane-dense packed batch tile (FP = F*pack)
    # w_ref: (FP, pack) VMEM  block-diagonal weight (built once in wrapper)
    # b_ref: (1,)      SMEM  bias scalar
    # o_ref: (pack, TR) VMEM  lane-dense output slab
    z = jnp.dot(x_ref[...], w_ref[...],
                preferred_element_type=jnp.float32)        # MXU (idle otherwise): (TR, pack)
    y = jax.nn.sigmoid(z + b_ref[0]) * scale                # EUP sigmoid + VPU scale
    # Sublane->lane relayout once (XLU), so the store is a contiguous unmasked vst.
    o_ref[...] = jnp.transpose(y).astype(o_ref.dtype)       # (pack, TR)


def _choose_tiling(B, F, pack, tb):
    """Pick (tb, num_tiles): tb = batch rows per grid step."""
    unit = 8 * pack          # minimum granularity (sublane alignment after packing)
    grid_unit = 128 * pack   # granularity when gridded (keeps TR = tb/pack a multiple of 128)

    if tb is None:
        tb = max(unit, _TARGET_TILE_BYTES // (F * 4))   # bytes-based target, not row count

    # v7x megacore / pipelining: force >= _MIN_GRID_STEPS steps when B is large enough.
    if B >= _MIN_GRID_STEPS * grid_unit:
        tb = min(tb, _cdiv(B, _MIN_GRID_STEPS))

    b_single = _round_up(B, unit)
    if tb >= b_single:
        return b_single, 1                              # one tile covers the whole batch

    tb = max(grid_unit, _round_up(tb, grid_unit))
    num_tiles = _cdiv(B, tb)
    if num_tiles == 1:
        return b_single, 1
    # Rebalance so the final tile is not mostly padding.
    tb = _round_up(_cdiv(B, num_tiles), grid_unit)
    num_tiles = _cdiv(B, tb)
    return tb, num_tiles


def concat_layer_forward(x, weight, bias, dataset, *, tb=None):
    """Pallas implementation of ConcatLayer.forward.

    Args:
      x:      [B, F] float32
      weight: [1, F] float32  (PyTorch nn.Linear weight layout)
      bias:   [1]    float32
      dataset: str, 'avec17' -> scale 23, else 63
      tb:     optional batch-tile size override (rows; rounded to legal granularity)
    Returns:
      [B] float32 (0-d scalar when B == 1, matching torch .squeeze()).
    """
    B, F = x.shape
    scale = 23.0 if dataset == "avec17" else 63.0

    # Lane-densify the feature axis when it divides 128 (free row-major reshape).
    pack = 128 // F if (F < 128 and 128 % F == 0) else 1
    FP = F * pack

    tb, num_tiles = _choose_tiling(B, F, pack, tb)
    b_pad = num_tiles * tb
    TR = tb // pack                                      # packed rows per tile

    x_pad = jnp.pad(x, ((0, b_pad - B), (0, 0))) if b_pad != B else x
    x2 = x_pad.reshape(b_pad // pack, FP)                # (B,F)->(B/pack, F*pack): metadata only

    # Block-diagonal weight (FP, pack), built once (hoisted out of the kernel):
    # w_bd[j*F + f, k] = w[f] if j == k else 0   ->   (x2 @ w_bd)[r, j] = x[pack*r + j, :] @ w
    w = weight.reshape(-1).astype(x.dtype)
    if pack > 1:
        eye = jnp.eye(pack, dtype=x.dtype)
        w_bd = (w[None, :, None] * eye[:, None, :]).reshape(FP, pack)
    else:
        w_bd = w.reshape(F, 1)
    bias = bias.reshape(1).astype(jnp.float32)

    cost = pl.CostEstimate(
        flops=2 * b_pad * F,
        transcendentals=b_pad,
        bytes_accessed=4 * b_pad * F + 4 * b_pad + 4 * FP * pack,
    )

    out = pl.pallas_call(
        functools.partial(_concat_layer_kernel, scale=scale),
        out_shape=jax.ShapeDtypeStruct((pack, b_pad // pack), x.dtype),
        grid=(num_tiles,),
        in_specs=[
            pl.BlockSpec((TR, FP), lambda i: (i, 0)),            # packed x tile per step
            pl.BlockSpec((FP, pack), lambda i: (0, 0)),           # block-diag weight, resident
            pl.BlockSpec(memory_space=pltpu.MemorySpace.SMEM),    # bias scalar in SMEM
        ],
        out_specs=pl.BlockSpec((pack, TR), lambda i: (0, i)),     # lane-dense output slab
        compiler_params=pltpu.CompilerParams(
            dimension_semantics=("parallel",)),
        cost_estimate=cost,
    )(x2, w_bd, bias)

    # out[j, i*TR + r] == y[i*tb + pack*r + j]; unscramble on B*4 bytes (negligible).
    y = (out.reshape(pack, num_tiles, TR)
            .transpose(1, 2, 0)
            .reshape(b_pad))[:B]
    # torch .squeeze(): (B,) stays (B,), B == 1 -> 0-d scalar
    return y.squeeze()


def init_params(key, feature_size):
    """Deterministic init matching nn.Linear(feature_size, 1) shapes."""
    kw, kb = jax.random.split(key)
    bound = 1.0 / (feature_size ** 0.5)
    weight = jax.random.uniform(kw, (1, feature_size), jnp.float32, -bound, bound)
    bias = jax.random.uniform(kb, (1,), jnp.float32, -bound, bound)
    return weight, bias


if __name__ == "__main__":
    key = jax.random.PRNGKey(0)
    kx, kp, kx2 = jax.random.split(key, 3)

    feature_size = 32
    weight, bias = init_params(kp, feature_size)

    # Small demo shape (batch=8, feature=32), dataset 'avec17' -> scale 23.
    batch = 8
    x = jax.random.normal(kx, (batch, feature_size), jnp.float32)
    y = jax.block_until_ready(concat_layer_forward(x, weight, bias, "avec17"))
    ref = (jax.nn.sigmoid(x @ weight.T + bias) * 23.0).squeeze()
    assert y.shape == (batch,)
    assert jnp.allclose(y, ref, atol=1e-4, rtol=1e-4)

    # Exercise the multi-tile grid + zero-padding path (B not a multiple of tb),
    # other-dataset branch -> scale 63.
    batch2 = 1200
    x2 = jax.random.normal(kx2, (batch2, feature_size), jnp.float32)
    y2 = jax.block_until_ready(
        concat_layer_forward(x2, weight, bias, "other_dataset", tb=512))
    ref2 = (jax.nn.sigmoid(x2 @ weight.T + bias) * 63.0).squeeze()
    assert y2.shape == (batch2,)
    assert jnp.allclose(y2, ref2, atol=1e-4, rtol=1e-4)

    print("KERNEL_OK")
</pallas_src>

<mosaic_0001>
module attributes {stable_mosaic.version = 11 : i64} {
  func.func @_concat_layer_kernel(%arg0: i32, %arg1: memref<8x128xf32, #tpu.memory_space<vmem>>, %arg2: memref<128x4xf32, #tpu.memory_space<vmem>>, %arg3: memref<1xf32, #tpu.memory_space<smem>>, %arg4: memref<4x8xf32, #tpu.memory_space<vmem>>) attributes {dimension_semantics = [#tpu.dimension_semantics<parallel>], iteration_bounds = array<i64: 1>, scalar_prefetch = 0 : i64, scratch_operands = 0 : i64, tpu.core_type = #tpu.core_type<tc>, window_params = [{transform_indices = @transform_0, window_bounds = array<i64: 8, 128>}, {pipeline_mode = #tpu.pipeline_mode<synchronous>, transform_indices = @transform_1, window_bounds = array<i64: 128, 4>}, {transform_indices = @transform_2, window_bounds = array<i64: 1>}, {transform_indices = @transform_3, window_bounds = array<i64: 4, 8>}]} {
    %c0 = arith.constant 0 : index
    %c0_0 = arith.constant 0 : index
    %0 = vector.load %arg1[%c0, %c0_0] : memref<8x128xf32, #tpu.memory_space<vmem>>, vector<8x128xf32>
    %c0_1 = arith.constant 0 : index
    %c0_2 = arith.constant 0 : index
    %1 = vector.load %arg2[%c0_1, %c0_2] : memref<128x4xf32, #tpu.memory_space<vmem>>, vector<128x4xf32>
    %cst = arith.constant dense<0.000000e+00> : vector<8x4xf32>
    %2 = tpu.matmul %0, %1, %cst {dimension_numbers = #tpu.dot_dimension_numbers<[1], [0], [0], [1], [0, 0, 1, 1], [], []>} : vector<8x128xf32>, vector<128x4xf32>, vector<8x4xf32> -> vector<8x4xf32>
    %c0_3 = arith.constant 0 : index
    %3 = memref.load %arg3[%c0_3] : memref<1xf32, #tpu.memory_space<smem>>
    %4 = vector.broadcast %3 : f32 to vector<8x4xf32>
    %5 = arith.addf %2, %4 : vector<8x4xf32>
    %6 = arith.negf %5 : vector<8x4xf32>
    %7 = math.exp %6 : vector<8x4xf32>
    %cst_4 = arith.constant 1.000000e+00 : f32
    %8 = vector.broadcast %cst_4 : f32 to vector<8x4xf32>
    %9 = arith.addf %8, %7 : vector<8x4xf32>
    %10 = arith.divf %8, %9 : vector<8x4xf32>
    %cst_5 = arith.constant 2.300000e+01 : f32
    %11 = vector.broadcast %cst_5 : f32 to vector<8x4xf32>
    %12 = arith.mulf %10, %11 : vector<8x4xf32>
    %13 = tpu.transpose %12, [1, 0] : vector<8x4xf32> -> vector<4x8xf32>
    %c0_6 = arith.constant 0 : index
    %c0_7 = arith.constant 0 : index
    %14 = vector.load %arg4[%c0_6, %c0_7] : memref<4x8xf32, #tpu.memory_space<vmem>>, vector<4x8xf32>
    tpu.vector_store %arg4[%c0_6, %c0_7], %13 {strides = array<i32>} : memref<4x8xf32, #tpu.memory_space<vmem>>, vector<4x8xf32>,
    return
  }
  func.func @transform_0(%arg0: i32) -> (i32, i32) {
    %c0_i32 = arith.constant 0 : i32
    %c0_i32_0 = arith.constant 0 : i32
    return %arg0, %c0_i32 : i32, i32
  }
  func.func @transform_1(%arg0: i32) -> (i32, i32) {
    %c0_i32 = arith.constant 0 : i32
    %c0_i32_0 = arith.constant 0 : i32
    %c0_i32_1 = arith.constant 0 : i32
    return %c0_i32, %c0_i32_0 : i32, i32
  }
  func.func @transform_2(%arg0: i32) -> i32 {
    %c0_i32 = arith.constant 0 : i32
    %c0_i32_0 = arith.constant 0 : i32
    return %c0_i32 : i32
  }
  func.func @transform_3(%arg0: i32) -> (i32, i32) {
    %c0_i32 = arith.constant 0 : i32
    %c0_i32_0 = arith.constant 0 : i32
    return %c0_i32, %arg0 : i32, i32
  }
}

</mosaic_0001>

<llo_original>
// kernel: tpu_custom_call.1
$region0: #{tpu_custom_call.1}
  #allocation0 [shape = 'u32[]', space=smem, size = 0x4, offset = 0x4, fixed_abs, tag = 'smem constant byte address 0x4 - core index']
  #allocation1 [shape = 'u32[144,128]{1,0:T(1,128)}', space=vmem, size = 0x12000, scoped, tag = 'internal scratch']
  #allocation2 [shape = 'f32[1]{0:T(128)S(6)}', space=smem, size = 0x200, scoped, tag = 'scoped memory for tpu_custom_call.1']
  %s0 = inlined_call_operand.vmem [shape: f32[8,128], index: 0, kind: input, shape index: {}]
  %s1 = inlined_call_operand.vmem [shape: f32[128,4], index: 1, kind: input, shape index: {}]
  %s2 = inlined_call_operand.<no memory space> [shape: f32[1], index: 2, kind: input, shape index: {}]
  %s3 = inlined_call_operand.hbm [shape: f32[4,8], index: 3, kind: output, shape index: {}]
  %s4 = sld [smem:[#allocation0]]
  $region22: #{tpu_custom_call.1} parent=0
    _
  %s6 = ssub.s32 1, %s4
  %s7 = scalar_select 0, %s6, %s4
  %8 = sst [smem:[#allocation2]] %s2
  $region1: #{tpu_custom_call.1} parent=0
    #allocation3 [shape = 'u8[2048]{0}', space=vmem, size = 0x800, scoped, tag = 'output window, operand 0, single buffered']
    #allocation4 [shape = 's32[1]{0}', space=sflag, size = 0x4, scoped, tag = 'scoped memory for tpu_custom_call.1']
    %9 = vsyncpa [#allocation4], 0
    // Predicated region
    $region2: #{tpu_custom_call.1} parent=1 // pred_check
      _
    $region3: #{tpu_custom_call.1} parent=1 // pred_check_branch
      %11 = sbr.rel (0) target = $region5
    $region4: #{tpu_custom_call.1} parent=1 // pred_region
      _
    $region5: #{tpu_custom_call.1} parent=1 // pred_fallthru
      _
    // Predicated region
    $region6: #{tpu_custom_call.1} parent=1 // pred_check
      _
    $region7: #{tpu_custom_call.1} parent=1 // pred_check_branch
      %13 = sbr.rel (0) target = $region9
    $region8: #{tpu_custom_call.1} parent=1 // pred_region
      _
    $region9: #{tpu_custom_call.1} parent=1 // pred_fallthru
      _
    // Predicated region
    $region10: #{tpu_custom_call.1} parent=1 // pred_check
      _
    $region11: #{tpu_custom_call.1} parent=1 // pred_check_branch
      %15 = sbr.rel (0) target = $region13
    $region12: #{tpu_custom_call.1} parent=1 // pred_region
      _
    $region13: #{tpu_custom_call.1} parent=1 // pred_fallthru
      _
    %v16 = vld [vmem:[%s0] sm:$0xff]
    %v17 = vld [vmem:[%s1] sm:$0xff]
    %v18 = vld [vmem:[%s1 + $0x8] sm:$0xff]
    %v19 = vld [vmem:[%s1 + $0x10] sm:$0xff]
    %v20 = vld [vmem:[%s1 + $0x18] sm:$0xff]
    %v21 = vld [vmem:[%s1 + $0x20] sm:$0xff]
    %v22 = vld [vmem:[%s1 + $0x28] sm:$0xff]
    %v23 = vld [vmem:[%s1 + $0x30] sm:$0xff]
    %v24 = vld [vmem:[%s1 + $0x38] sm:$0xff]
    %v25 = vld [vmem:[%s1 + $0x40] sm:$0xff]
    %v26 = vld [vmem:[%s1 + $0x48] sm:$0xff]
    %v27 = vld [vmem:[%s1 + $0x50] sm:$0xff]
    %v28 = vld [vmem:[%s1 + $0x58] sm:$0xff]
    %v29 = vld [vmem:[%s1 + $0x60] sm:$0xff]
    %v30 = vld [vmem:[%s1 + $0x68] sm:$0xff]
    %v31 = vld [vmem:[%s1 + $0x70] sm:$0xff]
    %v32 = vld [vmem:[%s1 + $0x78] sm:$0xff]
    %s33 = sld [smem:[#allocation2]]
    %v34 = vstv %s33
    %35 = vmatprep.subr.mxu0 0.0
    %36 = vmatpush1.msra.mxu0 %v32
    %37 = vmatprep.subr.mxu0 0.0
    %38 = vmatpush1.msra.mxu0 %v31
    %39 = vmatprep.subr.mxu0 0.0
    %40 = vmatpush1.msra.mxu0 %v30
    %41 = vmatprep.subr.mxu0 0.0
    %42 = vmatpush1.msra.mxu0 %v29
    %43 = vmatprep.subr.mxu0 0.0
    %44 = vmatpush1.msra.mxu0 %v28
    %45 = vmatprep.subr.mxu0 0.0
    %46 = vmatpush1.msra.mxu0 %v27
    %47 = vmatprep.subr.mxu0 0.0
    %48 = vmatpush1.msra.mxu0 %v26
    %49 = vmatprep.subr.mxu0 0.0
    %50 = vmatpush1.msra.mxu0 %v25
    %51 = vmatprep.subr.mxu0 0.0
    %52 = vmatpush1.msra.mxu0 %v24
    %53 = vmatprep.subr.mxu0 0.0
    %54 = vmatpush1.msra.mxu0 %v23
    %55 = vmatprep.subr.mxu0 0.0
    %56 = vmatpush1.msra.mxu0 %v22
    %57 = vmatprep.subr.mxu0 0.0
    %58 = vmatpush1.msra.mxu0 %v21
    %59 = vmatprep.subr.mxu0 0.0
    %60 = vmatpush1.msra.mxu0 %v20
    %61 = vmatprep.subr.mxu0 0.0
    %62 = vmatpush1.msra.mxu0 %v19
    %63 = vmatprep.subr.mxu0 0.0
    %64 = vmatpush1.msra.mxu0 %v18
    %65 = vmatprep.subr.mxu0 0.0
    %66 = vmatpush1.msra.mxu0 %v17
    %67 = vmatprep.subr.mxu0 0.0
    %68 = vmatpush2.msra.mxu0 0.0
    %69 = vmatprep.subr.mxu0 0.0
    %70 = vmatpush2.msra.mxu0 0.0
    %71 = vmatprep.subr.mxu0 0.0
    %72 = vmatpush2.msra.mxu0 0.0
    %73 = vmatprep.subr.mxu0 0.0
    %74 = vmatpush2.msra.mxu0 0.0
    %75 = vmatprep.subr.mxu0 0.0
    %76 = vmatpush2.msra.mxu0 0.0
    %77 = vmatprep.subr.mxu0 0.0
    %78 = vmatpush2.msra.mxu0 0.0
    %79 = vmatprep.subr.mxu0 0.0
    %80 = vmatpush2.msra.mxu0 0.0
    %81 = vmatprep.subr.mxu0 0.0
    %82 = vmatpush2.msra.mxu0 0.0
    %83 = vmatprep.subr.mxu0 0.0
    %84 = vmatpush2.msra.mxu0 0.0
    %85 = vmatprep.subr.mxu0 0.0
    %86 = vmatpush2.msra.mxu0 0.0
    %87 = vmatprep.subr.mxu0 0.0
    %88 = vmatpush2.msra.mxu0 0.0
    %89 = vmatprep.subr.mxu0 0.0
    %90 = vmatpush2.msra.mxu0 0.0
    %91 = vmatprep.subr.mxu0 0.0
    %92 = vmatpush2.msra.mxu0 0.0
    %93 = vmatprep.subr.mxu0 0.0
    %94 = vmatpush2.msra.mxu0 0.0
    %95 = vmatprep.subr.mxu0 0.0
    %96 = vmatpush2.msra.mxu0 0.0
    %97 = vmatprep.subr.mxu0 0.0
    %98 = vmatpush2.msra.mxu0 0.0
    %99 = vmatprep.mubr.f32.mxu0 0.0
    %100 = vmatmul.mubr.f32.gmra.mxu0 %v16
    %v101 = vpop.f32.mrf.mxu0
    %v102 = vadd.f32 %v34, %v101
    %v103 = vpop.f32.mrf.mxu0
    %104 = vdwg.mxu0
    %v105 = vxor.u32 %v102, 2147483648
    %v106 = vmul.f32 %v105, 1.442695
    %v107 = vpow.pop %v106
    %v108 = vadd.f32 %v107, 1.0
    %v109 = vrcp.pop %v108
    %v110 = vmul.f32 1.0, %v109
    %v111 = vmul.f32 %v110, 23.0
    %112 = vxpose.xlu0.b32.start [1/16] %v111, 128
    %113 = vxpose.xlu0.b32.cont [2/16] 0.0, 128
    %114 = vxpose.xlu0.b32.cont [3/16] 0.0, 128
    %115 = vxpose.xlu0.b32.cont [4/16] 0.0, 128
    %116 = vxpose.xlu0.b32.cont [5/16] 0.0, 128
    %117 = vxpose.xlu0.b32.cont [6/16] 0.0, 128
    %118 = vxpose.xlu0.b32.cont [7/16] 0.0, 128
    %119 = vxpose.xlu0.b32.cont [8/16] 0.0, 128
    %120 = vxpose.xlu0.b32.cont [9/16] 0.0, 128
    %121 = vxpose.xlu0.b32.cont [10/16] 0.0, 128
    %122 = vxpose.xlu0.b32.cont [11/16] 0.0, 128
    %123 = vxpose.xlu0.b32.cont [12/16] 0.0, 128
    %124 = vxpose.xlu0.b32.cont [13/16] 0.0, 128
    %125 = vxpose.xlu0.b32.cont [14/16] 0.0, 128
    %126 = vxpose.xlu0.b32.cont [15/16] 0.0, 128
    %127 = vxpose.xlu0.b32.end [16/16] 0.0, 128
    %v128 = vpop.trf.xlu0
    %v129 = vpop.trf.xlu0
    %v130 = vpop.trf.xlu0
    %v131 = vpop.trf.xlu0
    %v132 = vpop.trf.xlu0
    %v133 = vpop.trf.xlu0
    %v134 = vpop.trf.xlu0
    %v135 = vpop.trf.xlu0
    %v136 = vpop.trf.xlu0
    %v137 = vpop.trf.xlu0
    %v138 = vpop.trf.xlu0
    %v139 = vpop.trf.xlu0
    %v140 = vpop.trf.xlu0
    %v141 = vpop.trf.xlu0
    %v142 = vpop.trf.xlu0
    %v143 = vpop.trf.xlu0
    %vm144 = vcmask 60416
    %145 = vst.msk [vmem:[#allocation3] sm:$0xf] %vm144, %v128
    // Predicated region
    $region14: #{tpu_custom_call.1} parent=1 // pred_check
      _
    $region15: #{tpu_custom_call.1} parent=1 // pred_check_branch
      %147 = sbr.rel (0) target = $region17
    $region16: #{tpu_custom_call.1} parent=1 // pred_region
      %s149 = ssub.s32 64, 64
      %150 = vsyncadd [#allocation4], %s149
      %s152 = sshll.u32 [#allocation3], 4
      %s153 = int_to_ptr.vmem [resolvable:$true] %s152
      %155 = dma.vmem_to_hbm [thread:$0]  %s153, 64, %s3, [#allocation4]
    $region17: #{tpu_custom_call.1} parent=1 // pred_fallthru
      _
    // Predicated region
    $region18: #{tpu_custom_call.1} parent=1 // pred_check
      _
    $region19: #{tpu_custom_call.1} parent=1 // pred_check_branch
      %157 = sbr.rel (0) target = $region21
    $region20: #{tpu_custom_call.1} parent=1 // pred_region
      %158 = dma.done [#allocation4], 64
    $region21: #{tpu_custom_call.1} parent=1 // pred_fallthru
      _
    %159 = vsyncpa [#allocation4], 1

</llo_original>
